<compile_context>
chip_gen: v5e
topology: v5e:2x2
jax: 0.10.0
libtpu: 0.0.40
codegen_flags: <defaults>
</compile_context>

<pallas_src>
import functools
import math

import numpy as np
import jax
import jax.numpy as jnp
from jax import lax
from jax.experimental import pallas as pl
from jax.experimental.pallas import tpu as pltpu


# -----------------------------------------------------------------------------
# Stage 1: per-residue row/col terms (linear layers + PE fold-in). Tiny.
# -----------------------------------------------------------------------------
def _row_col_terms_kernel(seq_ref, idx_ref, div_ref, wemb_ref, bemb_ref,
                          wlr_ref, bproj_ref, row_ref, col_ref):
    # seq_ref : (1, L, d_seq)    idx_ref : (1, L, 1)    div_ref  : (1, K//4)
    # wemb_ref: (d_seq, d_emb)   bemb_ref: (1, d_emb)
    # wlr_ref : (d_emb, 2K)      bproj_ref: (1, K)
    # row_ref / col_ref : (1, L, K)
    K = wlr_ref.shape[1] // 2

    # seq embedding: Linear(d_seq, d_emb)
    semb = jnp.dot(seq_ref[0], wemb_ref[...],
                   preferred_element_type=jnp.float32) + bemb_ref[...]      # (L, d_emb)

    # cat(left, right, sep) @ W_proj == left@Wl + right@Wr + sep*wsep + b.
    # [Wl | Wr] are fused into a single (d_emb, 2K=256) weight: one 256-wide
    # MXU pass instead of two 128-wide ones.
    lr = jnp.dot(semb, wlr_ref[...], preferred_element_type=jnp.float32)    # (L, 2K)
    left = lr[:, :K]
    right = lr[:, K:]

    # 2D positional encoding per residue: cat(sin, cos)(idx * div_term).
    sin_inp = idx_ref[0] * div_ref[...]                                     # (L, K//4)
    pe = jnp.concatenate([jnp.sin(sin_inp), jnp.cos(sin_inp)], axis=-1)     # (L, K//2)
    z = jnp.zeros_like(pe)

    # Single full-width (128-lane, unmasked) store per output: zero-pad the PE
    # half instead of issuing four half-width masked stores.
    row_ref[0] = left + bproj_ref[...] + jnp.concatenate([pe, z], axis=-1)
    col_ref[0] = right + jnp.concatenate([z, pe], axis=-1)


# -----------------------------------------------------------------------------
# Stage 2: pair-map materialisation (the memory-bound O(B*L^2*K) part).
# -----------------------------------------------------------------------------
def _pair_tile(row_ref, col_ref, idxr_ref, idxc_ref, wsep_ref):
    K = row_ref.shape[2]
    row = row_ref[0]                                   # (TR, K)
    col = col_ref[0]                                   # (L, K)
    idx_r = idxr_ref[0]                                # (TR, 1)
    idx_c = idxc_ref[0]                                # (L, 1)  -- L on sublanes
    # |i - j| computed directly in the output's (sublane=L, lane=1) layout so
    # there is no lane->sublane relayout of the separation term.
    logsep = jnp.log(jnp.abs(idx_r[:, None, :] - idx_c[None, :, :]) + 1.0)  # (TR, L, 1)
    wsep = wsep_ref[...].reshape(1, 1, K)
    return row[:, None, :] + col[None, :, :] + logsep * wsep                # (TR, L, K) f32


def _pair_eval_kernel(row_ref, col_ref, idxr_ref, idxc_ref, wsep_ref, o_ref):
    o_ref[0] = _pair_tile(row_ref, col_ref, idxr_ref, idxc_ref,
                          wsep_ref).astype(o_ref.dtype)


def _pair_dropout_hw_kernel(seed_ref, row_ref, col_ref, idxr_ref, idxc_ref,
                            wsep_ref, o_ref, *, threshold):
    # TODO(synk): torch.nn.Dropout's RNG stream is not reproduced bit-for-bit;
    # the TPU hardware PRNG is used instead (same distribution / scaling).
    # The 1/(1-p) scale is pre-folded into row/col/wsep by the wrapper, so the
    # per-element work is: PRNG draw + one u32 compare + one select.
    y = _pair_tile(row_ref, col_ref, idxr_ref, idxc_ref, wsep_ref)
    tile_id = pl.program_id(0) * pl.num_programs(1) + pl.program_id(1)
    pltpu.prng_seed(seed_ref[0], tile_id)          # distinct stream per grid point
    bits = pltpu.prng_random_bits(y.shape)
    if bits.dtype != jnp.uint32:
        bits = pltpu.bitcast(bits, jnp.uint32)
    keep = bits >= jnp.uint32(threshold)           # raw 32-bit compare, no shift/cast
    o_ref[0] = jnp.where(keep, y, 0.0).astype(o_ref.dtype)


def _pair_dropout_hash_kernel(seed_ref, row_ref, col_ref, idxr_ref, idxc_ref,
                              wsep_ref, o_ref, *, threshold):
    # Portable stateless dropout mask (murmur-style integer mixer).  Used when
    # the TPU hardware PRNG is unavailable (e.g. interpret mode / CPU backend).
    y = _pair_tile(row_ref, col_ref, idxr_ref, idxc_ref, wsep_ref)
    shape = y.shape
    tile = (pl.program_id(0) * pl.num_programs(1)
            + pl.program_id(1)).astype(jnp.uint32)
    seed = seed_ref[0].astype(jnp.uint32)
    i0 = lax.broadcasted_iota(jnp.int32, shape, 0).astype(jnp.uint32)
    i1 = lax.broadcasted_iota(jnp.int32, shape, 1).astype(jnp.uint32)
    i2 = lax.broadcasted_iota(jnp.int32, shape, 2).astype(jnp.uint32)
    x = (i0 * jnp.uint32(shape[1]) + i1) * jnp.uint32(shape[2]) + i2
    x = x + tile * jnp.uint32(0x9E3779B1) + seed * jnp.uint32(0x85EBCA77)
    x = x ^ (x >> 16)
    x = x * jnp.uint32(0x7FEB352D)
    x = x ^ (x >> 15)
    x = x * jnp.uint32(0x846CA68B)
    x = x ^ (x >> 16)
    keep = x >= jnp.uint32(threshold)
    o_ref[0] = jnp.where(keep, y, 0.0).astype(o_ref.dtype)


# -----------------------------------------------------------------------------
# Generation-aware tiling helpers.
# -----------------------------------------------------------------------------
def _vmem_capacity_bytes():
    """Per-core VMEM capacity; conservative fallback when not on a TPU."""
    try:
        cap = int(pltpu.get_tpu_info().vmem_capacity_bytes)
        if cap > 0:
            return cap
    except Exception:
        pass
    return 64 << 20          # v7x has the smallest per-TC VMEM; assume that.


def _choose_row_tile(L, K, out_itemsize, *, training, vmem_cap):
    """Largest row tile TR (multiple of 8, or L itself) whose stage-2 working set
    -- double-buffered output block, double-buffered col_term, and (training)
    possibly-materialized f32 y / u32 random-bit intermediates -- stays well
    inside VMEM.  Never falls back to a full (L, L, K) block: the wrapper pads L
    up to a multiple of TR instead."""
    per_row_out = L * K * out_itemsize
    per_row = 2 * per_row_out + (L * K * 8 if training else 0) + 2 * K * 4
    fixed = 2 * L * K * 4 + (4 << 20)                 # col_term (x2) + headroom
    budget = max(int(vmem_cap * 0.6) - fixed, 1 << 20)
    tr = budget // per_row
    tr = min(tr, max(1, (24 << 20) // per_row_out))   # keep DMA blocks modest
    if tr >= L:
        return L
    return int(max(8, (tr // 8) * 8))


def _vmem_limit_bytes(TR, L, K, out_itemsize, *, training, vmem_cap):
    out_blk = TR * L * K * out_itemsize
    inter = TR * L * K * 8 if training else 0         # f32 y + u32 bits, if materialized
    in_blk = (TR * K + L * K + K) * 4 + (TR + L) * 4
    need = 2 * out_blk + inter + 2 * in_blk + (4 << 20)
    cap = int(vmem_cap * 0.75)                        # ~48 MiB on v7x, ~96 MiB on v5e/v6e
    return int(min(max(need, 32 << 20), cap))


# -----------------------------------------------------------------------------
# Wrapper.
# -----------------------------------------------------------------------------
def pair_emb_wo_templ(seq, idx, W_emb, b_emb, W_proj, b_proj, div_term, *,
                      p_drop=0.1, training=False, seed=0, row_tile=None,
                      out_dtype=None, hw_prng=None):
    """Pallas forward of Pair_emb_wo_templ.

    seq     : (B, L, d_seq)           idx     : (B, L) residue indices
    W_emb   : (d_seq, d_emb)          b_emb   : (d_emb,)     d_emb = d_model // 2
    W_proj  : (2*d_emb+1, d_model)    b_proj  : (d_model,)   (transposed torch Linear)
    div_term: (d_model // 4,)
    Returns (B, L, L, d_model) in `out_dtype` (default: seq.dtype, bf16 stays bf16).
    """
    B, L, d_seq = seq.shape
    d_emb = W_emb.shape[1]
    K = W_proj.shape[1]
    assert W_proj.shape[0] == 2 * d_emb + 1 and K == 2 * d_emb
    assert K % 4 == 0 and div_term.shape[0] == K // 4
    Kq = K // 4
    out_dtype = np.dtype(out_dtype if out_dtype is not None else seq.dtype)
    out_itemsize = out_dtype.itemsize
    use_dropout = bool(training) and p_drop > 0.0
    if use_dropout:
        assert 0.0 < p_drop < 1.0
    if hw_prng is None:
        hw_prng = jax.default_backend() == "tpu"

    f32 = jnp.float32
    idx_f = idx.astype(f32)

    # ---- stage 1: (B, L, K) row / column terms --------------------------------
    wlr = jnp.concatenate([W_proj[:d_emb], W_proj[d_emb:2 * d_emb]],
                          axis=1).astype(f32)                           # (d_emb, 2K)
    wsep = W_proj[2 * d_emb].astype(f32).reshape(1, K)
    row_term, col_term = pl.pallas_call(
        _row_col_terms_kernel,
        out_shape=(jax.ShapeDtypeStruct((B, L, K), f32),
                   jax.ShapeDtypeStruct((B, L, K), f32)),
        grid=(B,),
        in_specs=[
            pl.BlockSpec((1, L, d_seq), lambda b: (b, 0, 0)),   # seq
            pl.BlockSpec((1, L, 1), lambda b: (b, 0, 0)),       # idx (sublane axis)
            pl.BlockSpec((1, Kq), lambda b: (0, 0)),            # div_term
            pl.BlockSpec((d_seq, d_emb), lambda b: (0, 0)),     # W_emb
            pl.BlockSpec((1, d_emb), lambda b: (0, 0)),         # b_emb
            pl.BlockSpec((d_emb, 2 * K), lambda b: (0, 0)),     # [W_left | W_right]
            pl.BlockSpec((1, K), lambda b: (0, 0)),             # b_proj
        ],
        out_specs=(pl.BlockSpec((1, L, K), lambda b: (b, 0, 0)),
                   pl.BlockSpec((1, L, K), lambda b: (b, 0, 0))),
        compiler_params=pltpu.CompilerParams(dimension_semantics=("parallel",)),
    )(seq.astype(f32), idx_f.reshape(B, L, 1),
      div_term.astype(f32).reshape(1, Kq),
      W_emb.astype(f32), b_emb.astype(f32).reshape(1, d_emb),
      wlr, b_proj.astype(f32).reshape(1, K))

    # Fold the inverted-dropout scale into the (K x smaller) stage-1 terms so the
    # per-element multiply disappears from the stage-2 hot loop.
    if use_dropout:
        scale = np.float32(1.0 / (1.0 - p_drop))
        row_term = row_term * scale
        col_term = col_term * scale
        wsep = wsep * scale

    # ---- stage 2: pair map, tiled over (batch, row tiles) ---------------------
    vmem_cap = _vmem_capacity_bytes()
    if row_tile is not None:
        TR = int(row_tile)
        assert TR == L or TR % 8 == 0, f"row_tile {TR} must be L or a multiple of 8"
    else:
        TR = _choose_row_tile(L, K, out_itemsize, training=use_dropout,
                              vmem_cap=vmem_cap)
    TR = min(TR, L)
    nrt = pl.cdiv(L, TR)
    Lp = nrt * TR                        # padded row count (sliced off afterwards)

    idx_rc = idx_f.reshape(B, L, 1)      # residue index, L on the sublane axis
    row_in, idx_rows = row_term, idx_rc
    if Lp != L:
        pad = ((0, 0), (0, Lp - L), (0, 0))
        row_in = jnp.pad(row_term, pad)
        idx_rows = jnp.pad(idx_rc, pad)

    in_specs = [
        pl.BlockSpec((1, TR, K), lambda b, r: (b, r, 0)),    # row_term tile
        pl.BlockSpec((1, L, K), lambda b, r: (b, 0, 0)),     # col_term (full)
        pl.BlockSpec((1, TR, 1), lambda b, r: (b, r, 0)),    # idx rows tile
        pl.BlockSpec((1, L, 1), lambda b, r: (b, 0, 0)),     # idx cols (full, sublanes)
        pl.BlockSpec((1, K), lambda b, r: (0, 0)),           # w_sep
    ]
    out_spec = pl.BlockSpec((1, TR, L, K), lambda b, r: (b, r, 0, 0))
    out_shape = jax.ShapeDtypeStruct((B, Lp, L, K), out_dtype)
    cost = pl.CostEstimate(
        flops=4 * B * Lp * L * K,
        transcendentals=B * Lp * L,
        bytes_accessed=(B * Lp * L * K * out_itemsize
                        + B * (Lp + L * nrt) * K * 4))
    cparams = pltpu.CompilerParams(
        dimension_semantics=("parallel", "parallel"),     # both TCs on v7x
        vmem_limit_bytes=_vmem_limit_bytes(TR, L, K, out_itemsize,
                                           training=use_dropout,
                                           vmem_cap=vmem_cap))

    if not use_dropout:
        out = pl.pallas_call(
            _pair_eval_kernel,
            out_shape=out_shape, grid=(B, nrt),
            in_specs=in_specs, out_specs=out_spec,
            compiler_params=cparams, cost_estimate=cost,
        )(row_in, col_term, idx_rows, idx_rc, wsep)
    else:
        threshold = min(int(round(p_drop * float(1 << 32))), (1 << 32) - 1)
        kern = _pair_dropout_hw_kernel if hw_prng else _pair_dropout_hash_kernel
        kernel = functools.partial(kern, threshold=threshold)
        seed_arr = jnp.array([seed], dtype=jnp.int32)
        out = pl.pallas_call(
            kernel,
            out_shape=out_shape, grid=(B, nrt),
            in_specs=[pl.BlockSpec(memory_space=pltpu.MemorySpace.SMEM)] + in_specs,
            out_specs=out_spec,
            compiler_params=cparams, cost_estimate=cost,
        )(seed_arr, row_in, col_term, idx_rows, idx_rc, wsep)

    return out if Lp == L else out[:, :L]


# -----------------------------------------------------------------------------
# Pure-JAX reference (eval mode), a direct transcription of the PyTorch module.
# -----------------------------------------------------------------------------
def _reference_forward(seq, idx, W_emb, b_emb, W_proj, b_proj, div_term):
    B, L, _ = seq.shape
    d_emb = W_emb.shape[1]
    K = W_proj.shape[1]
    Kh = K // 2
    hi = lax.Precision.HIGHEST
    semb = jnp.dot(seq, W_emb, precision=hi) + b_emb                  # (B, L, d_emb)
    left = jnp.broadcast_to(semb[:, :, None, :], (B, L, L, d_emb))
    right = jnp.broadcast_to(semb[:, None, :, :], (B, L, L, d_emb))
    seqsep = jnp.log(jnp.abs(idx[:, :, None] - idx[:, None, :]) + 1.0)[..., None]
    pair = jnp.concatenate([left, right, seqsep], axis=-1)
    pair = jnp.dot(pair, W_proj, precision=hi) + b_proj               # (B, L, L, K)
    sin_inp = idx[:, :, None] * div_term[None, None, :]
    emb = jnp.concatenate([jnp.sin(sin_inp), jnp.cos(sin_inp)], axis=-1)
    pe = jnp.concatenate([jnp.broadcast_to(emb[:, :, None, :], (B, L, L, Kh)),
                          jnp.broadcast_to(emb[:, None, :, :], (B, L, L, Kh))],
                         axis=-1)
    return pair + pe


if __name__ == "__main__":
    B, L = 2, 16
    d_model = 128              # K (module default; keeps the output lane-dense)
    d_seq = 32                 # small sequence-feature dim for the demo
    d_emb = d_model // 2

    key = jax.random.PRNGKey(0)
    k1, k2, k3, k4, k5, k6 = jax.random.split(key, 6)

    # Round weights/activations to bf16-representable f32 so the MXU's f32 pass
    # decomposition is exact and the kernel/reference comparison stays tight.
    bf = lambda a: a.astype(jnp.bfloat16).astype(jnp.float32)
    seq = bf(jax.random.normal(k1, (B, L, d_seq), dtype=jnp.float32))
    idx = (jnp.arange(L, dtype=jnp.float32)[None, :]
           + jax.random.randint(k2, (B, 1), 0, 32).astype(jnp.float32))     # (B, L)
    W_emb = bf(0.1 * jax.random.normal(k3, (d_seq, d_emb), dtype=jnp.float32))
    b_emb = bf(0.1 * jax.random.normal(k4, (d_emb,), dtype=jnp.float32))
    W_proj = bf(0.1 * jax.random.normal(k5, (2 * d_emb + 1, d_model), dtype=jnp.float32))
    b_proj = bf(0.1 * jax.random.normal(k6, (d_model,), dtype=jnp.float32))
    d_model_half = d_model // 2
    div_term = jnp.exp(jnp.arange(0.0, d_model_half, 2.0, dtype=jnp.float32)
                       * -(math.log(10000.0) / d_model_half))               # (d_model//4,)

    ref = _reference_forward(seq, idx, W_emb, b_emb, W_proj, b_proj, div_term)

    # Eval mode (dropout = identity), explicit row tiling: 2 row tiles / batch.
    out = pair_emb_wo_templ(seq, idx, W_emb, b_emb, W_proj, b_proj, div_term,
                            training=False, row_tile=8)
    out = jax.block_until_ready(out)
    assert out.shape == (B, L, L, d_model) and out.dtype == jnp.float32
    # Tolerance covers Mosaic-vs-XLA f32 matmul pass-decomposition differences.
    assert jnp.allclose(out, ref, atol=1e-2, rtol=1e-2), \
        float(jnp.max(jnp.abs(out - ref)))

    # Eval mode with the automatic, generation-aware row-tile chooser.
    out2 = jax.block_until_ready(
        pair_emb_wo_templ(seq, idx, W_emb, b_emb, W_proj, b_proj, div_term))
    assert out2.shape == (B, L, L, d_model)
    assert jnp.allclose(out2, ref, atol=1e-2, rtol=1e-2)

    # Training mode: inverted dropout (hardware PRNG on TPU, portable hash mask
    # on other backends / interpret mode).
    p = 0.1
    out_tr = jax.block_until_ready(
        pair_emb_wo_templ(seq, idx, W_emb, b_emb, W_proj, b_proj, div_term,
                          training=True, p_drop=p, seed=1234, row_tile=8))
    scale = 1.0 / (1.0 - p)
    kept_ok = jnp.abs(out_tr - out * scale) <= (1e-2 + 1e-2 * jnp.abs(out) * scale)
    assert bool(jnp.all((out_tr == 0.0) | kept_ok))
    drop_frac = float(jnp.mean((out_tr == 0.0).astype(jnp.float32)))
    assert 0.02 < drop_frac < 0.3, drop_frac

    print("KERNEL_OK")
</pallas_src>

<mosaic_0001>
module attributes {stable_mosaic.version = 11 : i64} {
  func.func @_row_col_terms_kernel(%arg0: i32, %arg1: memref<1x16x32xf32, #tpu.memory_space<vmem>>, %arg2: memref<1x16x1xf32, #tpu.memory_space<vmem>>, %arg3: memref<1x32xf32, #tpu.memory_space<vmem>>, %arg4: memref<32x64xf32, #tpu.memory_space<vmem>>, %arg5: memref<1x64xf32, #tpu.memory_space<vmem>>, %arg6: memref<64x256xf32, #tpu.memory_space<vmem>>, %arg7: memref<1x128xf32, #tpu.memory_space<vmem>>, %arg8: memref<1x16x128xf32, #tpu.memory_space<vmem>>, %arg9: memref<1x16x128xf32, #tpu.memory_space<vmem>>) attributes {dimension_semantics = [#tpu.dimension_semantics<parallel>], iteration_bounds = array<i64: 2>, scalar_prefetch = 0 : i64, scratch_operands = 0 : i64, tpu.core_type = #tpu.core_type<tc>, window_params = [{transform_indices = @transform_0, window_bounds = array<i64: 1, 16, 32>}, {transform_indices = @transform_1, window_bounds = array<i64: 1, 16, 1>}, {pipeline_mode = #tpu.pipeline_mode<synchronous>, transform_indices = @transform_2, window_bounds = array<i64: 1, 32>}, {pipeline_mode = #tpu.pipeline_mode<synchronous>, transform_indices = @transform_3, window_bounds = array<i64: 32, 64>}, {pipeline_mode = #tpu.pipeline_mode<synchronous>, transform_indices = @transform_4, window_bounds = array<i64: 1, 64>}, {pipeline_mode = #tpu.pipeline_mode<synchronous>, transform_indices = @transform_5, window_bounds = array<i64: 64, 256>}, {pipeline_mode = #tpu.pipeline_mode<synchronous>, transform_indices = @transform_6, window_bounds = array<i64: 1, 128>}, {transform_indices = @transform_7, window_bounds = array<i64: 1, 16, 128>}, {transform_indices = @transform_8, window_bounds = array<i64: 1, 16, 128>}]} {
    %c0 = arith.constant 0 : index
    %c0_0 = arith.constant 0 : index
    %c0_1 = arith.constant 0 : index
    %0 = vector.load %arg1[%c0, %c0_0, %c0_1] : memref<1x16x32xf32, #tpu.memory_space<vmem>>, vector<1x16x32xf32>
    %1 = vector.shape_cast %0 : vector<1x16x32xf32> to vector<16x32xf32>
    %c0_2 = arith.constant 0 : index
    %c0_3 = arith.constant 0 : index
    %2 = vector.load %arg4[%c0_2, %c0_3] : memref<32x64xf32, #tpu.memory_space<vmem>>, vector<32x64xf32>
    %cst = arith.constant dense<0.000000e+00> : vector<16x64xf32>
    %3 = tpu.matmul %1, %2, %cst {dimension_numbers = #tpu.dot_dimension_numbers<[1], [0], [0], [1], [0, 0, 1, 1], [], []>} : vector<16x32xf32>, vector<32x64xf32>, vector<16x64xf32> -> vector<16x64xf32>
    %c0_4 = arith.constant 0 : index
    %c0_5 = arith.constant 0 : index
    %4 = vector.load %arg5[%c0_4, %c0_5] : memref<1x64xf32, #tpu.memory_space<vmem>>, vector<1x64xf32>
    %5 = vector.broadcast %4 : vector<1x64xf32> to vector<16x64xf32>
    %6 = arith.addf %3, %5 : vector<16x64xf32>
    %c0_6 = arith.constant 0 : index
    %c0_7 = arith.constant 0 : index
    %7 = vector.load %arg6[%c0_6, %c0_7] : memref<64x256xf32, #tpu.memory_space<vmem>>, vector<64x256xf32>
    %cst_8 = arith.constant dense<0.000000e+00> : vector<16x256xf32>
    %8 = tpu.matmul %6, %7, %cst_8 {dimension_numbers = #tpu.dot_dimension_numbers<[1], [0], [0], [1], [0, 0, 1, 1], [], []>} : vector<16x64xf32>, vector<64x256xf32>, vector<16x256xf32> -> vector<16x256xf32>
    %9 = vector.extract_strided_slice %8 {offsets = [0, 0], sizes = [16, 128], strides = [1, 1]} : vector<16x256xf32> to vector<16x128xf32>
    %10 = vector.extract_strided_slice %8 {offsets = [0, 128], sizes = [16, 128], strides = [1, 1]} : vector<16x256xf32> to vector<16x128xf32>
    %c0_9 = arith.constant 0 : index
    %c0_10 = arith.constant 0 : index
    %c0_11 = arith.constant 0 : index
    %11 = vector.load %arg2[%c0_9, %c0_10, %c0_11] : memref<1x16x1xf32, #tpu.memory_space<vmem>>, vector<1x16x1xf32>
    %12 = vector.shape_cast %11 : vector<1x16x1xf32> to vector<16x1xf32>
    %c0_12 = arith.constant 0 : index
    %c0_13 = arith.constant 0 : index
    %13 = vector.load %arg3[%c0_12, %c0_13] : memref<1x32xf32, #tpu.memory_space<vmem>>, vector<1x32xf32>
    %14 = vector.broadcast %12 : vector<16x1xf32> to vector<16x32xf32>
    %15 = vector.broadcast %13 : vector<1x32xf32> to vector<16x32xf32>
    %16 = arith.mulf %14, %15 : vector<16x32xf32>
    %17 = math.sin %16 : vector<16x32xf32>
    %18 = math.cos %16 : vector<16x32xf32>
    %19 = tpu.concatenate %17, %18 in 1 : vector<16x32xf32>, vector<16x32xf32> -> vector<16x64xf32>
    %cst_14 = arith.constant 0.000000e+00 : f32
    %20 = vector.broadcast %cst_14 : f32 to vector<16x64xf32>
    %c0_15 = arith.constant 0 : index
    %c0_16 = arith.constant 0 : index
    %21 = vector.load %arg7[%c0_15, %c0_16] : memref<1x128xf32, #tpu.memory_space<vmem>>, vector<1x128xf32>
    %22 = vector.broadcast %21 : vector<1x128xf32> to vector<16x128xf32>
    %23 = arith.addf %9, %22 : vector<16x128xf32>
    %24 = tpu.concatenate %19, %20 in 1 : vector<16x64xf32>, vector<16x64xf32> -> vector<16x128xf32>
    %25 = arith.addf %23, %24 : vector<16x128xf32>
    %c0_17 = arith.constant 0 : index
    %c0_18 = arith.constant 0 : index
    %c0_19 = arith.constant 0 : index
    %26 = vector.load %arg8[%c0_17, %c0_18, %c0_19] : memref<1x16x128xf32, #tpu.memory_space<vmem>>, vector<1x16x128xf32>
    %27 = vector.shape_cast %26 : vector<1x16x128xf32> to vector<16x128xf32>
    %28 = vector.shape_cast %25 : vector<16x128xf32> to vector<1x16x128xf32>
    tpu.vector_store %arg8[%c0_17, %c0_18, %c0_19], %28 {strides = array<i32>} : memref<1x16x128xf32, #tpu.memory_space<vmem>>, vector<1x16x128xf32>,
    %29 = tpu.concatenate %20, %19 in 1 : vector<16x64xf32>, vector<16x64xf32> -> vector<16x128xf32>
    %30 = arith.addf %10, %29 : vector<16x128xf32>
    %c0_20 = arith.constant 0 : index
    %c0_21 = arith.constant 0 : index
    %c0_22 = arith.constant 0 : index
    %31 = vector.load %arg9[%c0_20, %c0_21, %c0_22] : memref<1x16x128xf32, #tpu.memory_space<vmem>>, vector<1x16x128xf32>
    %32 = vector.shape_cast %31 : vector<1x16x128xf32> to vector<16x128xf32>
    %33 = vector.shape_cast %30 : vector<16x128xf32> to vector<1x16x128xf32>
    tpu.vector_store %arg9[%c0_20, %c0_21, %c0_22], %33 {strides = array<i32>} : memref<1x16x128xf32, #tpu.memory_space<vmem>>, vector<1x16x128xf32>,
    return
  }
  func.func @transform_0(%arg0: i32) -> (i32, i32, i32) {
    %c0_i32 = arith.constant 0 : i32
    %c0_i32_0 = arith.constant 0 : i32
    %c0_i32_1 = arith.constant 0 : i32
    return %arg0, %c0_i32, %c0_i32_0 : i32, i32, i32
  }
  func.func @transform_1(%arg0: i32) -> (i32, i32, i32) {
    %c0_i32 = arith.constant 0 : i32
    %c0_i32_0 = arith.constant 0 : i32
    %c0_i32_1 = arith.constant 0 : i32
    return %arg0, %c0_i32, %c0_i32_0 : i32, i32, i32
  }
  func.func @transform_2(%arg0: i32) -> (i32, i32) {
    %c0_i32 = arith.constant 0 : i32
    %c0_i32_0 = arith.constant 0 : i32
    %c0_i32_1 = arith.constant 0 : i32
    return %c0_i32, %c0_i32_0 : i32, i32
  }
  func.func @transform_3(%arg0: i32) -> (i32, i32) {
    %c0_i32 = arith.constant 0 : i32
    %c0_i32_0 = arith.constant 0 : i32
    %c0_i32_1 = arith.constant 0 : i32
    return %c0_i32, %c0_i32_0 : i32, i32
  }
  func.func @transform_4(%arg0: i32) -> (i32, i32) {
    %c0_i32 = arith.constant 0 : i32
    %c0_i32_0 = arith.constant 0 : i32
    %c0_i32_1 = arith.constant 0 : i32
    return %c0_i32, %c0_i32_0 : i32, i32
  }
  func.func @transform_5(%arg0: i32) -> (i32, i32) {
    %c0_i32 = arith.constant 0 : i32
    %c0_i32_0 = arith.constant 0 : i32
    %c0_i32_1 = arith.constant 0 : i32
    return %c0_i32, %c0_i32_0 : i32, i32
  }
  func.func @transform_6(%arg0: i32) -> (i32, i32) {
    %c0_i32 = arith.constant 0 : i32
    %c0_i32_0 = arith.constant 0 : i32
    %c0_i32_1 = arith.constant 0 : i32
    return %c0_i32, %c0_i32_0 : i32, i32
  }
  func.func @transform_7(%arg0: i32) -> (i32, i32, i32) {
    %c0_i32 = arith.constant 0 : i32
    %c0_i32_0 = arith.constant 0 : i32
    %c0_i32_1 = arith.constant 0 : i32
    return %arg0, %c0_i32, %c0_i32_0 : i32, i32, i32
  }
  func.func @transform_8(%arg0: i32) -> (i32, i32, i32) {
    %c0_i32 = arith.constant 0 : i32
    %c0_i32_0 = arith.constant 0 : i32
    %c0_i32_1 = arith.constant 0 : i32
    return %arg0, %c0_i32, %c0_i32_0 : i32, i32, i32
  }
}

</mosaic_0001>

<llo_original>
// kernel: tpu_custom_call.1
$region0: #{tpu_custom_call.1}
  #allocation0 [shape = 'u32[]', space=smem, size = 0x4, offset = 0x4, fixed_abs, tag = 'smem constant byte address 0x4 - core index']
  #allocation1 [shape = 'u32[72,128]{1,0:T(1,128)}', space=vmem, size = 0x9000, scoped, tag = 'internal scratch']
  %s0 = inlined_call_operand.vmem [shape: f32[2,16,32], index: 0, kind: input, shape index: {}]
  %s1 = inlined_call_operand.vmem [shape: f32[2,16,1], index: 1, kind: input, shape index: {}]
  %s2 = inlined_call_operand.vmem [shape: f32[1,32], index: 2, kind: input, shape index: {}]
  %s3 = inlined_call_operand.hbm [shape: f32[32,64], index: 3, kind: input, shape index: {}]
  %s4 = inlined_call_operand.vmem [shape: f32[1,64], index: 4, kind: input, shape index: {}]
  %s5 = inlined_call_operand.hbm [shape: f32[64,256], index: 5, kind: input, shape index: {}]
  %s6 = inlined_call_operand.vmem [shape: f32[1,128], index: 6, kind: input, shape index: {}]
  %s7 = inlined_call_operand.hbm [shape: f32[2,16,128], index: 7, kind: output, shape index: {0}]
  %s8 = inlined_call_operand.hbm [shape: f32[2,16,128], index: 8, kind: output, shape index: {1}]
  %9 = xla_tuple %s7, %s8
  %s10 = sld [smem:[#allocation0]]
  $region77: #{tpu_custom_call.1} parent=0
    _
  %s12 = ssub.s32 1, %s10
  %s13 = scalar_select 0, %s12, %s10
  $region1: #{tpu_custom_call.1} parent=0
    #allocation2 [shape = 'u8[16384]{0}', space=vmem, size = 0x4000, scoped, tag = 'input window, operand 3, single buffered']
    #allocation3 [shape = 's32[2]{0}', space=sflag, size = 0x8, scoped, tag = 'scoped memory for tpu_custom_call.1']
    #allocation4 [shape = 's32[2]{0}', space=sflag, size = 0x8, scoped, tag = 'scoped memory for tpu_custom_call.1']
    #allocation5 [shape = 'u8[65536]{0}', space=vmem, size = 0x10000, scoped, tag = 'input window, operand 5, single buffered']
    #allocation6 [shape = 's32[1]{0}', space=sflag, size = 0x4, scoped, tag = 'scoped memory for tpu_custom_call.1']
    #allocation7 [shape = 'u8[16384]{0}', space=vmem, size = 0x4000, scoped, tag = 'output window, operand 0']
    #allocation8 [shape = 'u8[16384]{0}', space=vmem, size = 0x4000, scoped, tag = 'output window, operand 1']
    #allocation9 [shape = 's32[2]{0}', space=sflag, size = 0x8, scoped, tag = 'scoped memory for tpu_custom_call.1']
    %14 = vsyncpa [#allocation3], 0
    %15 = vsyncpa [#allocation6], 0
    %16 = vsyncpa [#allocation4], 0
    %s17 = scalar_lea.sflag [#allocation4], 1
    %18 = vsyncpa %s17, 0
    %19 = vsyncpa [#allocation9], 0
    %s20 = scalar_lea.sflag [#allocation9], 1
    %21 = vsyncpa %s20, 0
    loop: start=0, step=1, limit=4
    $region2: #{tpu_custom_call.1} parent=1 // loop_pre_header
      _
    $region3: #{tpu_custom_call.1} parent=1 // loop_header
      %s23 = sphi 0, %s27
      %p24 = scmp.ge.s32.totalorder %s23, 4
      %s33 = sphi 0, %s35
      %s36 = sphi 0, %s33
      %s37 = sphi 0, %s36
      %s53 = sphi 0, %s37
      %s59 = sphi 0, %s61
      %s62 = sphi 0, %s59
      %s63 = sphi 0, %s62
      %s79 = sphi 0, %s63
      %s83 = sphi 0, %s83
      %s85 = sphi 0, %s83
      %s86 = sphi 0, %s85
      %s100 = sphi 0, %s86
      %s104 = sphi 0, %s104
      %s106 = sphi 0, %s104
      %s107 = sphi 0, %s106
      %s121 = sphi 0, %s107
      %s125 = sphi 0, %s125
      %s127 = sphi 0, %s125
      %s128 = sphi 0, %s127
      %s142 = sphi 0, %s128
      %s146 = sphi 0, %s146
      %s148 = sphi 0, %s146
      %s149 = sphi 0, %s148
      %s163 = sphi 0, %s149
      %s167 = sphi 0, %s167
      %s169 = sphi 0, %s167
      %s170 = sphi 0, %s169
      %s184 = sphi 0, %s170
      %s190 = sphi 0, %s192
      %s193 = sphi 0, %s190
      %s194 = sphi 0, %s193
      %s210 = sphi 0, %s194
      %s216 = sphi 0, %s218
      %s219 = sphi 0, %s216
      %s220 = sphi 0, %s219
      %s236 = sphi 0, %s220
    $region4: #{tpu_custom_call.1} parent=1 // loop_header_branch
      %26 = sbr.rel (%p24) target = $region8
    $region5: #{tpu_custom_call.1} parent=1 // loop_body
      %s28 = ssub.s32 %s23, 1
      %s29 = ssub.s32 %s23, 2
      %s30 = sadd.s32 %s23, 1
      %s31 = ssub.s32 %s23, %s30
      %p32 = scmp.eq.s32.totalorder %s31, 0
      %s34 = sadd.s32 %s33, 1
      %s35 = scalar_select %p32, %s33, %s34
      %p38 = pneg %p32
      %p39 = scmp.eq.s32.totalorder %s23, 1
      %p40 = por %p38, %p39
      %p41 = scmp.ne.s32.totalorder %s33, %s36
      %p42 = scmp.eq.s32.totalorder %s23, 0
      %p43 = por %p41, %p42
      %p44 = scmp.ne.s32.totalorder %s33, %s36
      %p45 = scmp.eq.s32.totalorder %s28, 1
      %p46 = por %p44, %p45
      %p47 = scmp.ne.s32.totalorder %s36, %s37
      %p48 = scmp.eq.s32.totalorder %s28, 0
      %p49 = por %p47, %p48
      %p50 = scmp.ne.s32.totalorder %s36, %s37
      %p51 = scmp.eq.s32.totalorder %s29, 1
      %p52 = por %p50, %p51
      %p54 = scmp.ne.s32.totalorder %s37, %s53
      %p55 = scmp.eq.s32.totalorder %s29, 0
      %p56 = por %p54, %p55
      %s57 = ssub.s32 %s23, %s30
      %p58 = scmp.eq.s32.totalorder %s57, 0
      %s60 = sadd.s32 %s59, 1
      %s61 = scalar_select %p58, %s59, %s60
      %p64 = pneg %p58
      %p65 = scmp.eq.s32.totalorder %s23, 1
      %p66 = por %p64, %p65
      %p67 = scmp.ne.s32.totalorder %s59, %s62
      %p68 = scmp.eq.s32.totalorder %s23, 0
      %p69 = por %p67, %p68
      %p70 = scmp.ne.s32.totalorder %s59, %s62
      %p71 = scmp.eq.s32.totalorder %s28, 1
      %p72 = por %p70, %p71
      %p73 = scmp.ne.s32.totalorder %s62, %s63
      %p74 = scmp.eq.s32.totalorder %s28, 0
      %p75 = por %p73, %p74
      %p76 = scmp.ne.s32.totalorder %s62, %s63
      %p77 = scmp.eq.s32.totalorder %s29, 1
      %p78 = por %p76, %p77
      %p80 = scmp.ne.s32.totalorder %s63, %s79
      %p81 = scmp.eq.s32.totalorder %s29, 0
      %p82 = por %p80, %p81
      %s84 = sadd.s32 %s83, 1
      %p87 = scmp.eq.s32.totalorder %s23, 1
      %p88 = scmp.ne.s32.totalorder %s83, %s85
      %p89 = scmp.eq.s32.totalorder %s23, 0
      %p90 = por %p88, %p89
      %p91 = scmp.ne.s32.totalorder %s83, %s85
      %p92 = scmp.eq.s32.totalorder %s28, 1
      %p93 = por %p91, %p92
      %p94 = scmp.ne.s32.totalorder %s85, %s86
      %p95 = scmp.eq.s32.totalorder %s28, 0
      %p96 = por %p94, %p95
      %p97 = scmp.ne.s32.totalorder %s85, %s86
      %p98 = scmp.eq.s32.totalorder %s29, 1
      %p99 = por %p97, %p98
      %p101 = scmp.ne.s32.totalorder %s86, %s100
      %p102 = scmp.eq.s32.totalorder %s29, 0
      %p103 = por %p101, %p102
      %s105 = sadd.s32 %s104, 1
      %p108 = scmp.eq.s32.totalorder %s23, 1
      %p109 = scmp.ne.s32.totalorder %s104, %s106
      %p110 = scmp.eq.s32.totalorder %s23, 0
      %p111 = por %p109, %p110
      %p112 = scmp.ne.s32.totalorder %s104, %s106
      %p113 = scmp.eq.s32.totalorder %s28, 1
      %p114 = por %p112, %p113
      %p115 = scmp.ne.s32.totalorder %s106, %s107
      %p116 = scmp.eq.s32.totalorder %s28, 0
      %p117 = por %p115, %p116
      %p118 = scmp.ne.s32.totalorder %s106, %s107
      %p119 = scmp.eq.s32.totalorder %s29, 1
      %p120 = por %p118, %p119
      %p122 = scmp.ne.s32.totalorder %s107, %s121
      %p123 = scmp.eq.s32.totalorder %s29, 0
      %p124 = por %p122, %p123
      %s126 = sadd.s32 %s125, 1
      %p129 = scmp.eq.s32.totalorder %s23, 1
      %p130 = scmp.ne.s32.totalorder %s125, %s127
      %p131 = scmp.eq.s32.totalorder %s23, 0
      %p132 = por %p130, %p131
      %p133 = scmp.ne.s32.totalorder %s125, %s127
      %p134 = scmp.eq.s32.totalorder %s28, 1
      %p135 = por %p133, %p134
      %p136 = scmp.ne.s32.totalorder %s127, %s128
      %p137 = scmp.eq.s32.totalorder %s28, 0
      %p138 = por %p136, %p137
      %p139 = scmp.ne.s32.totalorder %s127, %s128
      %p140 = scmp.eq.s32.totalorder %s29, 1
      %p141 = por %p139, %p140
      %p143 = scmp.ne.s32.totalorder %s128, %s142
      %p144 = scmp.eq.s32.totalorder %s29, 0
      %p145 = por %p143, %p144
      %s147 = sadd.s32 %s146, 1
      %p150 = scmp.eq.s32.totalorder %s23, 1
      %p151 = scmp.ne.s32.totalorder %s146, %s148
      %p152 = scmp.eq.s32.totalorder %s23, 0
      %p153 = por %p151, %p152
      %p154 = scmp.ne.s32.totalorder %s146, %s148
      %p155 = scmp.eq.s32.totalorder %s28, 1
      %p156 = por %p154, %p155
      %p157 = scmp.ne.s32.totalorder %s148, %s149
      %p158 = scmp.eq.s32.totalorder %s28, 0
      %p159 = por %p157, %p158
      %p160 = scmp.ne.s32.totalorder %s148, %s149
      %p161 = scmp.eq.s32.totalorder %s29, 1
      %p162 = por %p160, %p161
      %p164 = scmp.ne.s32.totalorder %s149, %s163
      %p165 = scmp.eq.s32.totalorder %s29, 0
      %p166 = por %p164, %p165
      %s168 = sadd.s32 %s167, 1
      %p171 = scmp.eq.s32.totalorder %s23, 1
      %p172 = scmp.ne.s32.totalorder %s167, %s169
      %p173 = scmp.eq.s32.totalorder %s23, 0
      %p174 = por %p172, %p173
      %p175 = scmp.ne.s32.totalorder %s167, %s169
      %p176 = scmp.eq.s32.totalorder %s28, 1
      %p177 = por %p175, %p176
      %p178 = scmp.ne.s32.totalorder %s169, %s170
      %p179 = scmp.eq.s32.totalorder %s28, 0
      %p180 = por %p178, %p179
      %p181 = scmp.ne.s32.totalorder %s169, %s170
      %p182 = scmp.eq.s32.totalorder %s29, 1
      %p183 = por %p181, %p182
      %p185 = scmp.ne.s32.totalorder %s170, %s184
      %p186 = scmp.eq.s32.totalorder %s29, 0
      %p187 = por %p185, %p186
      %s188 = ssub.s32 %s23, %s30
      %p189 = scmp.eq.s32.totalorder %s188, 0
      %s191 = sadd.s32 %s190, 1
      %s192 = scalar_select %p189, %s190, %s191
      %p195 = pneg %p189
      %p196 = scmp.eq.s32.totalorder %s23, 1
      %p197 = por %p195, %p196
      %p198 = scmp.ne.s32.totalorder %s190, %s193
      %p199 = scmp.eq.s32.totalorder %s23, 0
      %p200 = por %p198, %p199
      %p201 = scmp.ne.s32.totalorder %s190, %s193
      %p202 = scmp.eq.s32.totalorder %s28, 1
      %p203 = por %p201, %p202
      %p204 = scmp.ne.s32.totalorder %s193, %s194
      %p205 = scmp.eq.s32.totalorder %s28, 0
      %p206 = por %p204, %p205
      %p207 = scmp.ne.s32.totalorder %s193, %s194
      %p208 = scmp.eq.s32.totalorder %s29, 1
      %p209 = por %p207, %p208
      %p211 = scmp.ne.s32.totalorder %s194, %s210
      %p212 = scmp.eq.s32.totalorder %s29, 0
      %p213 = por %p211, %p212
      %s214 = ssub.s32 %s23, %s30
      %p215 = scmp.eq.s32.totalorder %s214, 0
      %s217 = sadd.s32 %s216, 1
      %s218 = scalar_select %p215, %s216, %s217
      %p221 = pneg %p215
      %p222 = scmp.eq.s32.totalorder %s23, 1
      %p223 = por %p221, %p222
      %p224 = scmp.ne.s32.totalorder %s216, %s219
      %p225 = scmp.eq.s32.totalorder %s23, 0
      %p226 = por %p224, %p225
      %p227 = scmp.ne.s32.totalorder %s216, %s219
      %p228 = scmp.eq.s32.totalorder %s28, 1
      %p229 = por %p227, %p228
      %p230 = scmp.ne.s32.totalorder %s219, %s220
      %p231 = scmp.eq.s32.totalorder %s28, 0
      %p232 = por %p230, %p231
      %p233 = scmp.ne.s32.totalorder %s219, %s220
      %p234 = scmp.eq.s32.totalorder %s29, 1
      %p235 = por %p233, %p234
      %p237 = scmp.ne.s32.totalorder %s220, %s236
      %p238 = scmp.eq.s32.totalorder %s29, 0
      %p239 = por %p237, %p238
      %p240 = scmp.le.s32.totalorder 1, %s23
      %p241 = scmp.lt.s32.totalorder %s23, 3
      %p242 = pnand %p240, %p241
      %p243 = pneg %p242
      // Predicated region
      $region9: #{tpu_custom_call.1} parent=5 // pred_check
        _
      $region10: #{tpu_custom_call.1} parent=5 // pred_check_branch
        %245 = sbr.rel (%p242) target = $region12
      $region11: #{tpu_custom_call.1} parent=5 // pred_region
        %s246 = ssub.s32 %s23, 1
        // Predicated region
        $region13: #{tpu_custom_call.1} parent=11 // pred_check
          %p247 = pneg %p96
        $region14: #{tpu_custom_call.1} parent=11 // pred_check_branch
          %249 = sbr.rel (%p247) target = $region16
        $region15: #{tpu_custom_call.1} parent=11 // pred_region
          _
        $region16: #{tpu_custom_call.1} parent=11 // pred_fallthru
          _
        // Predicated region
        $region17: #{tpu_custom_call.1} parent=11 // pred_check
          %p250 = pneg %p117
        $region18: #{tpu_custom_call.1} parent=11 // pred_check_branch
          %252 = sbr.rel (%p250) target = $region20
        $region19: #{tpu_custom_call.1} parent=11 // pred_region
          %254 = vsyncadd [#allocation3], 0
          %s255 = sshll.u32 %s3, 4
          %s256 = int_to_ptr.hbm [resolvable:$true] %s255
          %s257 = sshll.u32 [#allocation2], 4
          %s258 = int_to_ptr.vmem [resolvable:$true] %s257
          %263 = dma.hbm_to_vmem [thread:$0]  %s256, 512, %s258, [#allocation3], 128, 128, 8
        $region20: #{tpu_custom_call.1} parent=11 // pred_fallthru
          _
        // Predicated region
        $region21: #{tpu_custom_call.1} parent=11 // pred_check
          %p264 = pneg %p138
        $region22: #{tpu_custom_call.1} parent=11 // pred_check_branch
          %266 = sbr.rel (%p264) target = $region24
        $region23: #{tpu_custom_call.1} parent=11 // pred_region
          _
        $region24: #{tpu_custom_call.1} parent=11 // pred_fallthru
          _
        // Predicated region
        $region25: #{tpu_custom_call.1} parent=11 // pred_check
          %p267 = pneg %p159
        $region26: #{tpu_custom_call.1} parent=11 // pred_check_branch
          %269 = sbr.rel (%p267) target = $region28
        $region27: #{tpu_custom_call.1} parent=11 // pred_region
          %271 = vsyncadd [#allocation6], 0
          %s272 = sshll.u32 %s5, 4
          %s273 = int_to_ptr.hbm [resolvable:$true] %s272
          %s274 = sshll.u32 [#allocation5], 4
          %s275 = int_to_ptr.vmem [resolvable:$true] %s274
          %280 = dma.hbm_to_vmem [thread:$0]  %s273, 2048, %s275, [#allocation6], 256, 256, 16
        $region28: #{tpu_custom_call.1} parent=11 // pred_fallthru
          _
        // Predicated region
        $region29: #{tpu_custom_call.1} parent=11 // pred_check
          %p281 = pneg %p180
        $region30: #{tpu_custom_call.1} parent=11 // pred_check_branch
          %283 = sbr.rel (%p281) target = $region32
        $region31: #{tpu_custom_call.1} parent=11 // pred_region
          _
        $region32: #{tpu_custom_call.1} parent=11 // pred_fallthru
          _
      $region12: #{tpu_custom_call.1} parent=5 // pred_fallthru
        _
      %p284 = scmp.lt.s32.totalorder %s23, 2
      // Predicated region
      $region33: #{tpu_custom_call.1} parent=5 // pred_check
        %p285 = pneg %p284
      $region34: #{tpu_custom_call.1} parent=5 // pred_check_branch
        %287 = sbr.rel (%p285) target = $region36
      $region35: #{tpu_custom_call.1} parent=5 // pred_region
        // Predicated region
        $region37: #{tpu_custom_call.1} parent=35 // pred_check
          %p288 = pneg %p43
        $region38: #{tpu_custom_call.1} parent=35 // pred_check_branch
          %290 = sbr.rel (%p288) target = $region40
        $region39: #{tpu_custom_call.1} parent=35 // pred_region
          %p291 = scmp.lt.s32.totalorder %s23, 1
          %s292 = scalar_select %p291, %s23, 1
          %s293 = smul.addr %s292, 2
          %s294 = smul.addr %s293, 8
          %s295 = scalar_lea.vmem %s0, %s294
        $region40: #{tpu_custom_call.1} parent=35 // pred_fallthru
          _
        // Predicated region
        $region41: #{tpu_custom_call.1} parent=35 // pred_check
          %p296 = pneg %p69
        $region42: #{tpu_custom_call.1} parent=35 // pred_check_branch
          %298 = sbr.rel (%p296) target = $region44
        $region43: #{tpu_custom_call.1} parent=35 // pred_region
          %p299 = scmp.lt.s32.totalorder %s23, 1
          %s300 = scalar_select %p299, %s23, 1
          %s301 = smul.addr %s300, 2
          %s302 = smul.addr %s301, 8
          %s303 = scalar_lea.vmem %s1, %s302
        $region44: #{tpu_custom_call.1} parent=35 // pred_fallthru
          _
      $region36: #{tpu_custom_call.1} parent=5 // pred_fallthru
        _
      %p304 = scmp.le.s32.totalorder 1, %s23
      %p305 = scmp.lt.s32.totalorder %s23, 3
      %p306 = pnand %p304, %p305
      %p307 = pneg %p306
      // Predicated region
      $region45: #{tpu_custom_call.1} parent=5 // pred_check
        _
      $region46: #{tpu_custom_call.1} parent=5 // pred_check_branch
        %309 = sbr.rel (%p306) target = $region48
      $region47: #{tpu_custom_call.1} parent=5 // pred_region
        %s310 = ssub.s32 %s23, 1
        // Predicated region
        $region49: #{tpu_custom_call.1} parent=47 // pred_check
          %p311 = pneg %p117
        $region50: #{tpu_custom_call.1} parent=47 // pred_check_branch
          %313 = sbr.rel (%p311) target = $region52
        $region51: #{tpu_custom_call.1} parent=47 // pred_region
          %315 = dma.done [#allocation3], 512
        $region52: #{tpu_custom_call.1} parent=47 // pred_fallthru
          _
        // Predicated region
        $region53: #{tpu_custom_call.1} parent=47 // pred_check
          %p316 = pneg %p159
        $region54: #{tpu_custom_call.1} parent=47 // pred_check_branch
          %318 = sbr.rel (%p316) target = $region56
        $region55: #{tpu_custom_call.1} parent=47 // pred_region
          %320 = dma.done [#allocation6], 2048
        $region56: #{tpu_custom_call.1} parent=47 // pred_fallthru
          _
        %p321 = scmp.lt.s32.totalorder %s28, 1
        %s322 = scalar_select %p321, %s28, 1
        %s323 = smul.addr %s322, 2
        %s324 = smul.addr %s323, 8
        %s325 = scalar_lea.vmem %s0, %s324
        %p326 = pneg %p49
        %p327 = pneg %p46
        %p328 = scmp.lt.s32.totalorder %s28, 1
        %s329 = scalar_select %p328, %s28, 1
        %s330 = smul.addr %s329, 2
        %s331 = smul.addr %s330, 8
        %s332 = scalar_lea.vmem %s1, %s331
        %p333 = pneg %p75
        %p334 = pneg %p72
        %p335 = pneg %p96
        %p336 = pneg %p93
        %p337 = pneg %p117
        %p338 = pneg %p114
        %p339 = pneg %p138
        %p340 = pneg %p135
        %p341 = pneg %p159
        %p342 = pneg %p156
        %p343 = pneg %p180
        %p344 = pneg %p177
        %p345 = pneg %p206
        %p346 = pneg %p203
        %s347 = sand.u32 %s193, 1
        %s348 = scalar_lea.sflag [#allocation4], %s347
        %s349 = sand.u32 %s193, 1
        %s350 = smul.addr %s349, 16
        %s351 = scalar_lea.vmem [#allocation7], %s350
        %p352 = pneg %p232
        %p353 = pneg %p229
        %s354 = sand.u32 %s219, 1
        %s355 = scalar_lea.sflag [#allocation9], %s354
        %s356 = sand.u32 %s219, 1
        %s357 = smul.addr %s356, 16
        %s358 = scalar_lea.vmem [#allocation8], %s357
        %p359 = scmp.lt.s32.totalorder %s28, 1
        %s360 = scalar_select %p359, %s28, 1
        %s361 = smul.addr %s360, 2
        %s362 = smul.addr %s361, 8
        %s363 = scalar_lea.vmem %s0, %s362
        %p364 = scmp.lt.s32.totalorder %s28, 1
        %s365 = scalar_select %p364, %s28, 1
        %s366 = smul.addr %s365, 2
        %s367 = smul.addr %s366, 8
        %s368 = scalar_lea.vmem %s1, %s367
        %v369 = vld [vmem:[%s363] sm:$0xff]
        %v370 = vld [vmem:[%s363 + $0x8] sm:$0xff]
        %v371 = vld [vmem:[#allocation2] sm:$0xff]
        %v372 = vld [vmem:[#allocation2 + $0x8] sm:$0xff]
        %v373 = vld [vmem:[#allocation2 + $0x10] sm:$0xff]
        %v374 = vld [vmem:[#allocation2 + $0x18] sm:$0xff]
        %v375 = vld [vmem:[%s4] sm:$0x1]
        %v377 = vperm.slane %v375, 0
        %vm379 = vcmask 261120
        %v381 = vsel %vm379, %v369, 0
        %v384 = vsel %vm379, %v370, 0
        %386 = vmatpush.msra.mxu0 0.0
        %387 = vmatpush.msra.mxu0 0.0
        %388 = vmatpush.msra.mxu0 0.0
        %389 = vmatpush.msra.mxu0 0.0
        %390 = vmatpush.msra.mxu0 0.0
        %391 = vmatpush.msra.mxu0 0.0
        %392 = vmatpush.msra.mxu0 0.0
        %393 = vmatpush.msra.mxu0 0.0
        %394 = vmatpush.msra.mxu0 0.0
        %395 = vmatpush.msra.mxu0 0.0
        %396 = vmatpush.msra.mxu0 0.0
        %397 = vmatpush.msra.mxu0 0.0
        %398 = vmatpush.msra.mxu0 %v374
        %399 = vmatpush.msra.mxu0 %v373
        %400 = vmatpush.msra.mxu0 %v372
        %401 = vmatpush.msra.mxu0 %v371
        %402 = vmatmul.f32.gmra.mxu0 %v381
        %v403 = vpop.f32.mrf.mxu0
        %v404 = vadd.f32 %v377, %v403
        %405 = vmatmul.f32.gmra.mxu0 %v384
        %v406 = vpop.f32.mrf.mxu0
        %v407 = vadd.f32 %v377, %v406
        %408 = vdwg.mxu0
        %v409 = vld [vmem:[#allocation5] sm:$0xff]
        %v410 = vld [vmem:[#allocation5 + $0x8] sm:$0xff]
        %v411 = vld [vmem:[#allocation5 + $0x10] sm:$0xff]
        %v412 = vld [vmem:[#allocation5 + $0x18] sm:$0xff]
        %v413 = vld [vmem:[#allocation5 + $0x20] sm:$0xff]
        %v414 = vld [vmem:[#allocation5 + $0x28] sm:$0xff]
        %v415 = vld [vmem:[#allocation5 + $0x30] sm:$0xff]
        %v416 = vld [vmem:[#allocation5 + $0x38] sm:$0xff]
        %v417 = vld [vmem:[#allocation5 + $0x40] sm:$0xff]
        %v418 = vld [vmem:[#allocation5 + $0x48] sm:$0xff]
        %v419 = vld [vmem:[#allocation5 + $0x50] sm:$0xff]
        %v420 = vld [vmem:[#allocation5 + $0x58] sm:$0xff]
        %v421 = vld [vmem:[#allocation5 + $0x60] sm:$0xff]
        %v422 = vld [vmem:[#allocation5 + $0x68] sm:$0xff]
        %v423 = vld [vmem:[#allocation5 + $0x70] sm:$0xff]
        %v424 = vld [vmem:[#allocation5 + $0x78] sm:$0xff]
        %vm425 = vcmask 523264
        %v427 = vsel %vm425, %v404, 0
        %v430 = vsel %vm425, %v407, 0
        %432 = vmatpush.msra.mxu0 0.0
        %433 = vmatpush.msra.mxu0 0.0
        %434 = vmatpush.msra.mxu0 0.0
        %435 = vmatpush.msra.mxu0 0.0
        %436 = vmatpush.msra.mxu0 0.0
        %437 = vmatpush.msra.mxu0 0.0
        %438 = vmatpush.msra.mxu0 0.0
        %439 = vmatpush.msra.mxu0 0.0
        %440 = vmatpush.msra.mxu0 %v423
        %441 = vmatpush.msra.mxu0 %v421
        %442 = vmatpush.msra.mxu0 %v419
        %443 = vmatpush.msra.mxu0 %v417
        %444 = vmatpush.msra.mxu0 %v415
        %445 = vmatpush.msra.mxu0 %v413
        %446 = vmatpush.msra.mxu0 %v411
        %447 = vmatpush.msra.mxu0 %v409
        %448 = vmatmul.f32.gmra.mxu0 %v427
        %v449 = vpop.f32.mrf.mxu0
        %v450 = vadd.f32 0.0, %v449
        %451 = vmatmul.f32.gmra.mxu0 %v430
        %v452 = vpop.f32.mrf.mxu0
        %v453 = vadd.f32 0.0, %v452
        %454 = vdwg.mxu0
        %455 = vmatpush.msra.mxu0 0.0
        %456 = vmatpush.msra.mxu0 0.0
        %457 = vmatpush.msra.mxu0 0.0
        %458 = vmatpush.msra.mxu0 0.0
        %459 = vmatpush.msra.mxu0 0.0
        %460 = vmatpush.msra.mxu0 0.0
        %461 = vmatpush.msra.mxu0 0.0
        %462 = vmatpush.msra.mxu0 0.0
        %463 = vmatpush.msra.mxu0 %v424
        %464 = vmatpush.msra.mxu0 %v422
        %465 = vmatpush.msra.mxu0 %v420
        %466 = vmatpush.msra.mxu0 %v418
        %467 = vmatpush.msra.mxu0 %v416
        %468 = vmatpush.msra.mxu0 %v414
        %469 = vmatpush.msra.mxu0 %v412
        %470 = vmatpush.msra.mxu0 %v410
        %471 = vmatmul.f32.gmra.mxu0 %v427
        %v472 = vpop.f32.mrf.mxu0
        %v473 = vadd.f32 0.0, %v472
        %474 = vmatmul.f32.gmra.mxu0 %v430
        %v475 = vpop.f32.mrf.mxu0
        %v476 = vadd.f32 0.0, %v475
        %477 = vdwg.mxu0
        %v478 = vld [vmem:[%s368] sm:$0xff]
        %v479 = vld [vmem:[%s368 + $0x8] sm:$0xff]
        %v480 = vld [vmem:[%s2] sm:$0x1]
        %482 = vset.pattern.permute.xlu0 0
        %483 = vperm.xlu0 %482, %v478
        %v484 = vpop.permute.xlu0 %483
        %487 = vset.pattern.permute.xlu0 0
        %488 = vperm.xlu0 %487, %v479
        %v489 = vpop.permute.xlu0 %488
        %v492 = vperm.slane %v480, 0
        %v494 = vmul.f32 %v484, %v492
        %v495 = vmul.f32 %v489, %v492
        %v496 = vand.u32 2147483647, %v494
        %vm497 = vcmp.le.f32.partialorder %v496, 0.7853982
        %vm498 = vcmp.lt.s32.totalorder %v494, 0
        %v499 = vand.u32 %v494, 2139095040
        %v500 = vshrl.u32 %v499, 23
        %v501 = vsub.s32 %v500, 127
        %v502 = vand.u32 2147483647, %v494
        %v503 = vand.u32 %v502, 8388607
        %v504 = vor.u32 %v503, 8388608
        %v505 = vsub.s32 0, %v504
        %v506 = vadd.s32 %v501, 1
        %vm507 = vcmp.gt.s32.totalorder %v506, 0
        %v508 = vsel %vm507, %v506, 0
        %v509 = vshrl.u32 %v508, 5
        %v510 = vand.u32 %v508, 31
        %v511 = vsub.s32 32, %v510
        %v512 = vshrl.u32 683565275, %v511
        %v513 = vshll.u32 683565275, %v510
        %v514 = vshrl.u32 2475754826, %v511
        %v515 = vor.u32 %v513, %v514
        %v516 = vshll.u32 2475754826, %v510
        %v517 = vshrl.u32 2131351028, %v511
        %v518 = vor.u32 %v516, %v517
        %v519 = vshll.u32 2131351028, %v510
        %v520 = vshrl.u32 2102212464, %v511
        %v521 = vor.u32 %v519, %v520
        %v522 = vshll.u32 2102212464, %v510
        %v523 = vshrl.u32 920167782, %v511
        %v524 = vor.u32 %v522, %v523
        %v525 = vshll.u32 920167782, %v510
        %v526 = vshrl.u32 1326507024, %v511
        %v527 = vor.u32 %v525, %v526
        %vm528 = vcmp.lt.s32.totalorder %v509, 1
        %vm529 = vcmp.lt.s32.totalorder %v509, 2
        %vm530 = vcmp.lt.s32.totalorder %v509, 3
        %vm531 = vcmp.lt.s32.totalorder %v509, 4
        %v532 = vsel %vm528, %v512, %v515
        %v533 = vsel %vm531, %v521, 2102212464
        %v534 = vsel %vm530, %v518, %v533
        %v535 = vsel %vm529, %v532, %v534
        %v536 = vsel %vm528, %v515, %v518
        %v537 = vsel %vm531, %v524, 920167782
        %v538 = vsel %vm530, %v521, %v537
        %v539 = vsel %vm529, %v536, %v538
        %v540 = vsel %vm528, %v518, %v521
        %v541 = vsel %vm531, %v527, 1326507024
        %v542 = vsel %vm530, %v524, %v541
        %v543 = vsel %vm529, %v540, %v542
        %v544 = vshll.u32 %v504, 8
        %v545 = vand.u32 %v544, 65535
        %v546 = vshrl.u32 %v544, 16
        %v547 = vand.u32 %v543, 65535
        %v548 = vshrl.u32 %v543, 16
        %v549 = vmul.u32 %v545, %v547
        %v550 = vmul.u32 %v545, %v548
        %v551 = vmul.u32 %v546, %v547
        %v552 = vmul.u32 %v546, %v548
        %v553 = vshll.u32 %v550, 16
        %v554 = vshrl.u32 %v550, 16
        %v555 = vshll.u32 %v551, 16
        %v556 = vshrl.u32 %v551, 16
        %vm557 = vc.u32 %v549, %v553
        %v558 = vsel %vm557, 1, 0
        %v559 = vadd.s32 %v549, %v553
        %v560 = vadd.s32 %v552, %v558
        %vm561 = vc.u32 %v559, %v555
        %v562 = vsel %vm561, 1, 0
        %v563 = vadd.s32 %v559, %v555
        %v564 = vadd.s32 %v560, %v562
        %v565 = vadd.s32 %v564, %v554
        %v566 = vadd.s32 %v565, %v556
        %v567 = vand.u32 %v544, 65535
        %v568 = vshrl.u32 %v544, 16
        %v569 = vand.u32 %v539, 65535
        %v570 = vshrl.u32 %v539, 16
        %v571 = vmul.u32 %v567, %v569
        %v572 = vmul.u32 %v567, %v570
        %v573 = vmul.u32 %v568, %v569
        %v574 = vmul.u32 %v568, %v570
        %v575 = vshll.u32 %v572, 16
        %v576 = vshrl.u32 %v572, 16
        %v577 = vshll.u32 %v573, 16
        %v578 = vshrl.u32 %v573, 16
        %vm579 = vc.u32 %v571, %v575
        %v580 = vsel %vm579, 1, 0
        %v581 = vadd.s32 %v571, %v575
        %v582 = vadd.s32 %v574, %v580
        %vm583 = vc.u32 %v581, %v577
        %v584 = vsel %vm583, 1, 0
        %v585 = vadd.s32 %v581, %v577
        %v586 = vadd.s32 %v582, %v584
        %v587 = vadd.s32 %v586, %v576
        %v588 = vadd.s32 %v587, %v578
        %v589 = vmul.u32 %v544, %v535
        %v590 = vadd.s32 %v566, %v585
        %vm591 = vc.u32 %v566, %v585
        %v592 = vadd.s32 %v588, 1
        %v593 = vsel %vm591, %v592, %v588
        %v594 = vadd.s32 %v589, %v593
        %v595 = vadd.s32 %v594, 536870912
        %v596 = vshrl.u32 %v595, 30
        %v597 = vshll.u32 %v596, 30
        %v598 = vsub.s32 %v594, %v597
        %vm599 = vcmp.lt.s32.totalorder %v598, 0
        %v600 = vsub.s32 0, %v598
        %v601 = vsel %vm599, %v600, %v598
        %v602 = vclz %v601
        %v603 = vsub.s32 %v602, 2
        %vm604 = vcmp.gt.s32.totalorder 0, %v603
        %v605 = vsel %vm604, 0, %v603
        %v606 = vsub.s32 32, %v605
        %v607 = vshll.u32 %v598, %v605
        %v608 = vshrl.u32 %v590, %v606
        %v609 = vor.u32 %v607, %v608
        %v610 = vsub.s32 4294967266, %v605
        %v611 = vadd.s32 %v610, 127
        %v612 = vshll.u32 %v611, 23
        %v613 = vor.u32 4788187, %v612
        %v614 = vand.u32 2147483647, %v613
        %v616 = vcvt.s32.f32 %v609
        %v617 = vmul.f32 %v616, %v614
        %v618 = vxor.u32 %v617, 2147483648
        %v619 = vsel %vm498, %v618, %v617
        %v620 = vsub.s32 4, %v596
        %v621 = vsel %vm498, %v620, %v596
        %v622 = vsel %vm497, %v494, %v619
        %v623 = vsel %vm497, 0, %v621
        %v624 = vmul.f32 %v622, %v622
        %v625 = vmul.f32 %v624, -0.001358992
        %v626 = vadd.f32 %v625, 0.041655596
        %v627 = vmul.f32 %v624, %v626
        %v628 = vadd.f32 %v627, -0.4999988
        %v629 = vmul.f32 %v624, %v628
        %v630 = vadd.f32 1.0, %v629
        %v631 = vmul.f32 %v622, %v622
        %v632 = vmul.f32 %v631, -0.00019511016
        %v633 = vadd.f32 %v632, 0.008332121
        %v634 = vmul.f32 %v631, %v633
        %v635 = vadd.f32 %v634, -0.16666654
        %v636 = vmul.f32 %v631, %v635
        %v637 = vadd.f32 %v636, 1.0
        %v638 = vmul.f32 %v637, %v622
        %vm639 = vweird.f32 %v494
        %v640 = vadd.s32 %v623, 3
        %v641 = vand.u32 %v640, 3
        %vm642 = vcmp.lt.s32.totalorder %v641, 2
        %vm643 = vcmp.eq.s32.totalorder %v641, 0
        %v644 = vxor.u32 %v638, 2147483648
        %v645 = vsel %vm643, %v630, %v644
        %vm646 = vcmp.eq.s32.totalorder %v641, 2
        %v647 = vxor.u32 %v630, 2147483648
        %v648 = vsel %vm646, %v647, %v638
        %v649 = vsel %vm642, %v645, %v648
        %v650 = vsel %vm639, nan, %v649
        %v651 = vand.u32 2147483647, %v495
        %vm652 = vcmp.le.f32.partialorder %v651, 0.7853982
        %vm653 = vcmp.lt.s32.totalorder %v495, 0
        %v654 = vand.u32 %v495, 2139095040
        %v655 = vshrl.u32 %v654, 23
        %v656 = vsub.s32 %v655, 127
        %v657 = vand.u32 2147483647, %v495
        %v658 = vand.u32 %v657, 8388607
        %v659 = vor.u32 %v658, 8388608
        %v660 = vsub.s32 0, %v659
        %v661 = vadd.s32 %v656, 1
        %vm662 = vcmp.gt.s32.totalorder %v661, 0
        %v663 = vsel %vm662, %v661, 0
        %v664 = vshrl.u32 %v663, 5
        %v665 = vand.u32 %v663, 31
        %v666 = vsub.s32 32, %v665
        %v667 = vshrl.u32 683565275, %v666
        %v668 = vshll.u32 683565275, %v665
        %v669 = vshrl.u32 2475754826, %v666
        %v670 = vor.u32 %v668, %v669
        %v671 = vshll.u32 2475754826, %v665
        %v672 = vshrl.u32 2131351028, %v666
        %v673 = vor.u32 %v671, %v672
        %v674 = vshll.u32 2131351028, %v665
        %v675 = vshrl.u32 2102212464, %v666
        %v676 = vor.u32 %v674, %v675
        %v677 = vshll.u32 2102212464, %v665
        %v678 = vshrl.u32 920167782, %v666
        %v679 = vor.u32 %v677, %v678
        %v680 = vshll.u32 920167782, %v665
        %v681 = vshrl.u32 1326507024, %v666
        %v682 = vor.u32 %v680, %v681
        %vm683 = vcmp.lt.s32.totalorder %v664, 1
        %vm684 = vcmp.lt.s32.totalorder %v664, 2
        %vm685 = vcmp.lt.s32.totalorder %v664, 3
        %vm686 = vcmp.lt.s32.totalorder %v664, 4
        %v687 = vsel %vm683, %v667, %v670
        %v688 = vsel %vm686, %v676, 2102212464
        %v689 = vsel %vm685, %v673, %v688
        %v690 = vsel %vm684, %v687, %v689
        %v691 = vsel %vm683, %v670, %v673
        %v692 = vsel %vm686, %v679, 920167782
        %v693 = vsel %vm685, %v676, %v692
        %v694 = vsel %vm684, %v691, %v693
        %v695 = vsel %vm683, %v673, %v676
        %v696 = vsel %vm686, %v682, 1326507024
        %v697 = vsel %vm685, %v679, %v696
        %v698 = vsel %vm684, %v695, %v697
        %v699 = vshll.u32 %v659, 8
        %v700 = vand.u32 %v699, 65535
        %v701 = vshrl.u32 %v699, 16
        %v702 = vand.u32 %v698, 65535
        %v703 = vshrl.u32 %v698, 16
        %v704 = vmul.u32 %v700, %v702
        %v705 = vmul.u32 %v700, %v703
        %v706 = vmul.u32 %v701, %v702
        %v707 = vmul.u32 %v701, %v703
        %v708 = vshll.u32 %v705, 16
        %v709 = vshrl.u32 %v705, 16
        %v710 = vshll.u32 %v706, 16
        %v711 = vshrl.u32 %v706, 16
        %vm712 = vc.u32 %v704, %v708
        %v713 = vsel %vm712, 1, 0
        %v714 = vadd.s32 %v704, %v708
        %v715 = vadd.s32 %v707, %v713
        %vm716 = vc.u32 %v714, %v710
        %v717 = vsel %vm716, 1, 0
        %v718 = vadd.s32 %v714, %v710
        %v719 = vadd.s32 %v715, %v717
        %v720 = vadd.s32 %v719, %v709
        %v721 = vadd.s32 %v720, %v711
        %v722 = vand.u32 %v699, 65535
        %v723 = vshrl.u32 %v699, 16
        %v724 = vand.u32 %v694, 65535
        %v725 = vshrl.u32 %v694, 16
        %v726 = vmul.u32 %v722, %v724
        %v727 = vmul.u32 %v722, %v725
        %v728 = vmul.u32 %v723, %v724
        %v729 = vmul.u32 %v723, %v725
        %v730 = vshll.u32 %v727, 16
        %v731 = vshrl.u32 %v727, 16
        %v732 = vshll.u32 %v728, 16
        %v733 = vshrl.u32 %v728, 16
        %vm734 = vc.u32 %v726, %v730
        %v735 = vsel %vm734, 1, 0
        %v736 = vadd.s32 %v726, %v730
        %v737 = vadd.s32 %v729, %v735
        %vm738 = vc.u32 %v736, %v732
        %v739 = vsel %vm738, 1, 0
        %v740 = vadd.s32 %v736, %v732
        %v741 = vadd.s32 %v737, %v739
        %v742 = vadd.s32 %v741, %v731
        %v743 = vadd.s32 %v742, %v733
        %v744 = vmul.u32 %v699, %v690
        %v745 = vadd.s32 %v721, %v740
        %vm746 = vc.u32 %v721, %v740
        %v747 = vadd.s32 %v743, 1
        %v748 = vsel %vm746, %v747, %v743
        %v749 = vadd.s32 %v744, %v748
        %v750 = vadd.s32 %v749, 536870912
        %v751 = vshrl.u32 %v750, 30
        %v752 = vshll.u32 %v751, 30
        %v753 = vsub.s32 %v749, %v752
        %vm754 = vcmp.lt.s32.totalorder %v753, 0
        %v755 = vsub.s32 0, %v753
        %v756 = vsel %vm754, %v755, %v753
        %v757 = vclz %v756
        %v758 = vsub.s32 %v757, 2
        %vm759 = vcmp.gt.s32.totalorder 0, %v758
        %v760 = vsel %vm759, 0, %v758
        %v761 = vsub.s32 32, %v760
        %v762 = vshll.u32 %v753, %v760
        %v763 = vshrl.u32 %v745, %v761
        %v764 = vor.u32 %v762, %v763
        %v765 = vsub.s32 4294967266, %v760
        %v766 = vadd.s32 %v765, 127
        %v767 = vshll.u32 %v766, 23
        %v768 = vor.u32 4788187, %v767
        %v769 = vand.u32 2147483647, %v768
        %v771 = vcvt.s32.f32 %v764
        %v772 = vmul.f32 %v771, %v769
        %v773 = vxor.u32 %v772, 2147483648
        %v774 = vsel %vm653, %v773, %v772
        %v775 = vsub.s32 4, %v751
        %v776 = vsel %vm653, %v775, %v751
        %v777 = vsel %vm652, %v495, %v774
        %v778 = vsel %vm652, 0, %v776
        %v779 = vmul.f32 %v777, %v777
        %v780 = vmul.f32 %v779, -0.001358992
        %v781 = vadd.f32 %v780, 0.041655596
        %v782 = vmul.f32 %v779, %v781
        %v783 = vadd.f32 %v782, -0.4999988
        %v784 = vmul.f32 %v779, %v783
        %v785 = vadd.f32 1.0, %v784
        %v786 = vmul.f32 %v777, %v777
        %v787 = vmul.f32 %v786, -0.00019511016
        %v788 = vadd.f32 %v787, 0.008332121
        %v789 = vmul.f32 %v786, %v788
        %v790 = vadd.f32 %v789, -0.16666654
        %v791 = vmul.f32 %v786, %v790
        %v792 = vadd.f32 %v791, 1.0
        %v793 = vmul.f32 %v792, %v777
        %vm794 = vweird.f32 %v495
        %v795 = vadd.s32 %v778, 3
        %v796 = vand.u32 %v795, 3
        %vm797 = vcmp.lt.s32.totalorder %v796, 2
        %vm798 = vcmp.eq.s32.totalorder %v796, 0
        %v799 = vxor.u32 %v793, 2147483648
        %v800 = vsel %vm798, %v785, %v799
        %vm801 = vcmp.eq.s32.totalorder %v796, 2
        %v802 = vxor.u32 %v785, 2147483648
        %v803 = vsel %vm801, %v802, %v793
        %v804 = vsel %vm797, %v800, %v803
        %v805 = vsel %vm794, nan, %v804
        %v806 = vand.u32 2147483647, %v494
        %vm807 = vcmp.le.f32.partialorder %v806, 0.7853982
        %vm808 = vcmp.lt.s32.totalorder %v494, 0
        %v809 = vand.u32 %v494, 2139095040
        %v810 = vshrl.u32 %v809, 23
        %v811 = vsub.s32 %v810, 127
        %v812 = vand.u32 2147483647, %v494
        %v813 = vand.u32 %v812, 8388607
        %v814 = vor.u32 %v813, 8388608
        %v815 = vsub.s32 0, %v814
        %v816 = vadd.s32 %v811, 1
        %vm817 = vcmp.gt.s32.totalorder %v816, 0
        %v818 = vsel %vm817, %v816, 0
        %v819 = vshrl.u32 %v818, 5
        %v820 = vand.u32 %v818, 31
        %v821 = vsub.s32 32, %v820
        %v822 = vshrl.u32 683565275, %v821
        %v823 = vshll.u32 683565275, %v820
        %v824 = vshrl.u32 2475754826, %v821
        %v825 = vor.u32 %v823, %v824
        %v826 = vshll.u32 2475754826, %v820
        %v827 = vshrl.u32 2131351028, %v821
        %v828 = vor.u32 %v826, %v827
        %v829 = vshll.u32 2131351028, %v820
        %v830 = vshrl.u32 2102212464, %v821
        %v831 = vor.u32 %v829, %v830
        %v832 = vshll.u32 2102212464, %v820
        %v833 = vshrl.u32 920167782, %v821
        %v834 = vor.u32 %v832, %v833
        %v835 = vshll.u32 920167782, %v820
        %v836 = vshrl.u32 1326507024, %v821
        %v837 = vor.u32 %v835, %v836
        %vm838 = vcmp.lt.s32.totalorder %v819, 1
        %vm839 = vcmp.lt.s32.totalorder %v819, 2
        %vm840 = vcmp.lt.s32.totalorder %v819, 3
        %vm841 = vcmp.lt.s32.totalorder %v819, 4
        %v842 = vsel %vm838, %v822, %v825
        %v843 = vsel %vm841, %v831, 2102212464
        %v844 = vsel %vm840, %v828, %v843
        %v845 = vsel %vm839, %v842, %v844
        %v846 = vsel %vm838, %v825, %v828
        %v847 = vsel %vm841, %v834, 920167782
        %v848 = vsel %vm840, %v831, %v847
        %v849 = vsel %vm839, %v846, %v848
        %v850 = vsel %vm838, %v828, %v831
        %v851 = vsel %vm841, %v837, 1326507024
        %v852 = vsel %vm840, %v834, %v851
        %v853 = vsel %vm839, %v850, %v852
        %v854 = vshll.u32 %v814, 8
        %v855 = vand.u32 %v854, 65535
        %v856 = vshrl.u32 %v854, 16
        %v857 = vand.u32 %v853, 65535
        %v858 = vshrl.u32 %v853, 16
        %v859 = vmul.u32 %v855, %v857
        %v860 = vmul.u32 %v855, %v858
        %v861 = vmul.u32 %v856, %v857
        %v862 = vmul.u32 %v856, %v858
        %v863 = vshll.u32 %v860, 16
        %v864 = vshrl.u32 %v860, 16
        %v865 = vshll.u32 %v861, 16
        %v866 = vshrl.u32 %v861, 16
        %vm867 = vc.u32 %v859, %v863
        %v868 = vsel %vm867, 1, 0
        %v869 = vadd.s32 %v859, %v863
        %v870 = vadd.s32 %v862, %v868
        %vm871 = vc.u32 %v869, %v865
        %v872 = vsel %vm871, 1, 0
        %v873 = vadd.s32 %v869, %v865
        %v874 = vadd.s32 %v870, %v872
        %v875 = vadd.s32 %v874, %v864
        %v876 = vadd.s32 %v875, %v866
        %v877 = vand.u32 %v854, 65535
        %v878 = vshrl.u32 %v854, 16
        %v879 = vand.u32 %v849, 65535
        %v880 = vshrl.u32 %v849, 16
        %v881 = vmul.u32 %v877, %v879
        %v882 = vmul.u32 %v877, %v880
        %v883 = vmul.u32 %v878, %v879
        %v884 = vmul.u32 %v878, %v880
        %v885 = vshll.u32 %v882, 16
        %v886 = vshrl.u32 %v882, 16
        %v887 = vshll.u32 %v883, 16
        %v888 = vshrl.u32 %v883, 16
        %vm889 = vc.u32 %v881, %v885
        %v890 = vsel %vm889, 1, 0
        %v891 = vadd.s32 %v881, %v885
        %v892 = vadd.s32 %v884, %v890
        %vm893 = vc.u32 %v891, %v887
        %v894 = vsel %vm893, 1, 0
        %v895 = vadd.s32 %v891, %v887
        %v896 = vadd.s32 %v892, %v894
        %v897 = vadd.s32 %v896, %v886
        %v898 = vadd.s32 %v897, %v888
        %v899 = vmul.u32 %v854, %v845
        %v900 = vadd.s32 %v876, %v895
        %vm901 = vc.u32 %v876, %v895
        %v902 = vadd.s32 %v898, 1
        %v903 = vsel %vm901, %v902, %v898
        %v904 = vadd.s32 %v899, %v903
        %v905 = vadd.s32 %v904, 536870912
        %v906 = vshrl.u32 %v905, 30
        %v907 = vshll.u32 %v906, 30
        %v908 = vsub.s32 %v904, %v907
        %vm909 = vcmp.lt.s32.totalorder %v908, 0
        %v910 = vsub.s32 0, %v908
        %v911 = vsel %vm909, %v910, %v908
        %v912 = vclz %v911
        %v913 = vsub.s32 %v912, 2
        %vm914 = vcmp.gt.s32.totalorder 0, %v913
        %v915 = vsel %vm914, 0, %v913
        %v916 = vsub.s32 32, %v915
        %v917 = vshll.u32 %v908, %v915
        %v918 = vshrl.u32 %v900, %v916
        %v919 = vor.u32 %v917, %v918
        %v920 = vsub.s32 4294967266, %v915
        %v921 = vadd.s32 %v920, 127
        %v922 = vshll.u32 %v921, 23
        %v923 = vor.u32 4788187, %v922
        %v924 = vand.u32 2147483647, %v923
        %v926 = vcvt.s32.f32 %v919
        %v927 = vmul.f32 %v926, %v924
        %v928 = vxor.u32 %v927, 2147483648
        %v929 = vsel %vm808, %v928, %v927
        %v930 = vsub.s32 4, %v906
        %v931 = vsel %vm808, %v930, %v906
        %v932 = vsel %vm807, %v494, %v929
        %v933 = vsel %vm807, 0, %v931
        %v934 = vmul.f32 %v932, %v932
        %v935 = vmul.f32 %v934, -0.001358992
        %v936 = vadd.f32 %v935, 0.041655596
        %v937 = vmul.f32 %v934, %v936
        %v938 = vadd.f32 %v937, -0.4999988
        %v939 = vmul.f32 %v934, %v938
        %v940 = vadd.f32 1.0, %v939
        %v941 = vmul.f32 %v932, %v932
        %v942 = vmul.f32 %v941, -0.00019511016
        %v943 = vadd.f32 %v942, 0.008332121
        %v944 = vmul.f32 %v941, %v943
        %v945 = vadd.f32 %v944, -0.16666654
        %v946 = vmul.f32 %v941, %v945
        %v947 = vadd.f32 %v946, 1.0
        %v948 = vmul.f32 %v947, %v932
        %vm949 = vweird.f32 %v494
        %v950 = vand.u32 %v933, 3
        %vm951 = vcmp.lt.s32.totalorder %v950, 2
        %vm952 = vcmp.eq.s32.totalorder %v950, 0
        %v953 = vxor.u32 %v948, 2147483648
        %v954 = vsel %vm952, %v940, %v953
        %vm955 = vcmp.eq.s32.totalorder %v950, 2
        %v956 = vxor.u32 %v940, 2147483648
        %v957 = vsel %vm955, %v956, %v948
        %v958 = vsel %vm951, %v954, %v957
        %v959 = vsel %vm949, nan, %v958
        %v960 = vand.u32 2147483647, %v495
        %vm961 = vcmp.le.f32.partialorder %v960, 0.7853982
        %vm962 = vcmp.lt.s32.totalorder %v495, 0
        %v963 = vand.u32 %v495, 2139095040
        %v964 = vshrl.u32 %v963, 23
        %v965 = vsub.s32 %v964, 127
        %v966 = vand.u32 2147483647, %v495
        %v967 = vand.u32 %v966, 8388607
        %v968 = vor.u32 %v967, 8388608
        %v969 = vsub.s32 0, %v968
        %v970 = vadd.s32 %v965, 1
        %vm971 = vcmp.gt.s32.totalorder %v970, 0
        %v972 = vsel %vm971, %v970, 0
        %v973 = vshrl.u32 %v972, 5
        %v974 = vand.u32 %v972, 31
        %v975 = vsub.s32 32, %v974
        %v976 = vshrl.u32 683565275, %v975
        %v977 = vshll.u32 683565275, %v974
        %v978 = vshrl.u32 2475754826, %v975
        %v979 = vor.u32 %v977, %v978
        %v980 = vshll.u32 2475754826, %v974
        %v981 = vshrl.u32 2131351028, %v975
        %v982 = vor.u32 %v980, %v981
        %v983 = vshll.u32 2131351028, %v974
        %v984 = vshrl.u32 2102212464, %v975
        %v985 = vor.u32 %v983, %v984
        %v986 = vshll.u32 2102212464, %v974
        %v987 = vshrl.u32 920167782, %v975
        %v988 = vor.u32 %v986, %v987
        %v989 = vshll.u32 920167782, %v974
        %v990 = vshrl.u32 1326507024, %v975
        %v991 = vor.u32 %v989, %v990
        %vm992 = vcmp.lt.s32.totalorder %v973, 1
        %vm993 = vcmp.lt.s32.totalorder %v973, 2
        %vm994 = vcmp.lt.s32.totalorder %v973, 3
        %vm995 = vcmp.lt.s32.totalorder %v973, 4
        %v996 = vsel %vm992, %v976, %v979
        %v997 = vsel %vm995, %v985, 2102212464
        %v998 = vsel %vm994, %v982, %v997
        %v999 = vsel %vm993, %v996, %v998
        %v1000 = vsel %vm992, %v979, %v982
        %v1001 = vsel %vm995, %v988, 920167782
        %v1002 = vsel %vm994, %v985, %v1001
        %v1003 = vsel %vm993, %v1000, %v1002
        %v1004 = vsel %vm992, %v982, %v985
        %v1005 = vsel %vm995, %v991, 1326507024
        %v1006 = vsel %vm994, %v988, %v1005
        %v1007 = vsel %vm993, %v1004, %v1006
        %v1008 = vshll.u32 %v968, 8
        %v1009 = vand.u32 %v1008, 65535
        %v1010 = vshrl.u32 %v1008, 16
        %v1011 = vand.u32 %v1007, 65535
        %v1012 = vshrl.u32 %v1007, 16
        %v1013 = vmul.u32 %v1009, %v1011
        %v1014 = vmul.u32 %v1009, %v1012
        %v1015 = vmul.u32 %v1010, %v1011
        %v1016 = vmul.u32 %v1010, %v1012
        %v1017 = vshll.u32 %v1014, 16
        %v1018 = vshrl.u32 %v1014, 16
        %v1019 = vshll.u32 %v1015, 16
        %v1020 = vshrl.u32 %v1015, 16
        %vm1021 = vc.u32 %v1013, %v1017
        %v1022 = vsel %vm1021, 1, 0
        %v1023 = vadd.s32 %v1013, %v1017
        %v1024 = vadd.s32 %v1016, %v1022
        %vm1025 = vc.u32 %v1023, %v1019
        %v1026 = vsel %vm1025, 1, 0
        %v1027 = vadd.s32 %v1023, %v1019
        %v1028 = vadd.s32 %v1024, %v1026
        %v1029 = vadd.s32 %v1028, %v1018
        %v1030 = vadd.s32 %v1029, %v1020
        %v1031 = vand.u32 %v1008, 65535
        %v1032 = vshrl.u32 %v1008, 16
        %v1033 = vand.u32 %v1003, 65535
        %v1034 = vshrl.u32 %v1003, 16
        %v1035 = vmul.u32 %v1031, %v1033
        %v1036 = vmul.u32 %v1031, %v1034
        %v1037 = vmul.u32 %v1032, %v1033
        %v1038 = vmul.u32 %v1032, %v1034
        %v1039 = vshll.u32 %v1036, 16
        %v1040 = vshrl.u32 %v1036, 16
        %v1041 = vshll.u32 %v1037, 16
        %v1042 = vshrl.u32 %v1037, 16
        %vm1043 = vc.u32 %v1035, %v1039
        %v1044 = vsel %vm1043, 1, 0
        %v1045 = vadd.s32 %v1035, %v1039
        %v1046 = vadd.s32 %v1038, %v1044
        %vm1047 = vc.u32 %v1045, %v1041
        %v1048 = vsel %vm1047, 1, 0
        %v1049 = vadd.s32 %v1045, %v1041
        %v1050 = vadd.s32 %v1046, %v1048
        %v1051 = vadd.s32 %v1050, %v1040
        %v1052 = vadd.s32 %v1051, %v1042
        %v1053 = vmul.u32 %v1008, %v999
        %v1054 = vadd.s32 %v1030, %v1049
        %vm1055 = vc.u32 %v1030, %v1049
        %v1056 = vadd.s32 %v1052, 1
        %v1057 = vsel %vm1055, %v1056, %v1052
        %v1058 = vadd.s32 %v1053, %v1057
        %v1059 = vadd.s32 %v1058, 536870912
        %v1060 = vshrl.u32 %v1059, 30
        %v1061 = vshll.u32 %v1060, 30
        %v1062 = vsub.s32 %v1058, %v1061
        %vm1063 = vcmp.lt.s32.totalorder %v1062, 0
        %v1064 = vsub.s32 0, %v1062
        %v1065 = vsel %vm1063, %v1064, %v1062
        %v1066 = vclz %v1065
        %v1067 = vsub.s32 %v1066, 2
        %vm1068 = vcmp.gt.s32.totalorder 0, %v1067
        %v1069 = vsel %vm1068, 0, %v1067
        %v1070 = vsub.s32 32, %v1069
        %v1071 = vshll.u32 %v1062, %v1069
        %v1072 = vshrl.u32 %v1054, %v1070
        %v1073 = vor.u32 %v1071, %v1072
        %v1074 = vsub.s32 4294967266, %v1069
        %v1075 = vadd.s32 %v1074, 127
        %v1076 = vshll.u32 %v1075, 23
        %v1077 = vor.u32 4788187, %v1076
        %v1078 = vand.u32 2147483647, %v1077
        %v1080 = vcvt.s32.f32 %v1073
        %v1081 = vmul.f32 %v1080, %v1078
        %v1082 = vxor.u32 %v1081, 2147483648
        %v1083 = vsel %vm962, %v1082, %v1081
        %v1084 = vsub.s32 4, %v1060
        %v1085 = vsel %vm962, %v1084, %v1060
        %v1086 = vsel %vm961, %v495, %v1083
        %v1087 = vsel %vm961, 0, %v1085
        %v1088 = vmul.f32 %v1086, %v1086
        %v1089 = vmul.f32 %v1088, -0.001358992
        %v1090 = vadd.f32 %v1089, 0.041655596
        %v1091 = vmul.f32 %v1088, %v1090
        %v1092 = vadd.f32 %v1091, -0.4999988
        %v1093 = vmul.f32 %v1088, %v1092
        %v1094 = vadd.f32 1.0, %v1093
        %v1095 = vmul.f32 %v1086, %v1086
        %v1096 = vmul.f32 %v1095, -0.00019511016
        %v1097 = vadd.f32 %v1096, 0.008332121
        %v1098 = vmul.f32 %v1095, %v1097
        %v1099 = vadd.f32 %v1098, -0.16666654
        %v1100 = vmul.f32 %v1095, %v1099
        %v1101 = vadd.f32 %v1100, 1.0
        %v1102 = vmul.f32 %v1101, %v1086
        %vm1103 = vweird.f32 %v495
        %v1104 = vand.u32 %v1087, 3
        %vm1105 = vcmp.lt.s32.totalorder %v1104, 2
        %vm1106 = vcmp.eq.s32.totalorder %v1104, 0
        %v1107 = vxor.u32 %v1102, 2147483648
        %v1108 = vsel %vm1106, %v1094, %v1107
        %vm1109 = vcmp.eq.s32.totalorder %v1104, 2
        %v1110 = vxor.u32 %v1094, 2147483648
        %v1111 = vsel %vm1109, %v1110, %v1102
        %v1112 = vsel %vm1105, %v1108, %v1111
        %v1113 = vsel %vm1103, nan, %v1112
        %1116 = vrot.lane.b32.xlu0 %v959, 32
        %v1117 = vpop.permute.xlu0 %1116
        %1118 = vrot.lane.b32.xlu0 %v1113, 32
        %v1119 = vpop.permute.xlu0 %1118
        %v1122 = vsel %vm379, %v650, %v1117
        %v1123 = vsel %vm379, %v805, %v1119
        %v1124 = vld [vmem:[%s6] sm:$0x1]
        %v1126 = vperm.slane %v1124, 0
        %v1128 = vadd.f32 %v450, %v1126
        %v1129 = vadd.f32 %v453, %v1126
        %v1130 = vsel %vm425, %v1122, 0.0
        %v1131 = vsel %vm425, %v1123, 0.0
        %v1132 = vadd.f32 %v1128, %v1130
        %v1133 = vadd.f32 %v1129, %v1131
        %1134 = vst [vmem:[%s351] sm:$0xff] %v1132
        %1135 = vst [vmem:[%s351 + $0x8] sm:$0xff] %v1133
        %1138 = vrot.lane.b32.xlu0 %v1122, 64
        %v1139 = vpop.permute.xlu0 %1138
        %1140 = vrot.lane.b32.xlu0 %v1123, 64
        %v1141 = vpop.permute.xlu0 %1140
        %v1144 = vsel %vm425, 0.0, %v1139
        %v1145 = vsel %vm425, 0.0, %v1141
        %v1146 = vadd.f32 %v473, %v1144
        %v1147 = vadd.f32 %v476, %v1145
        %1148 = vst [vmem:[%s358] sm:$0xff] %v1146
        %1149 = vst [vmem:[%s358 + $0x8] sm:$0xff] %v1147
        %s1150 = sand.u32 %s193, 1
        %s1151 = scalar_lea.sflag [#allocation4], %s1150
        %s1152 = sand.u32 %s193, 1
        %s1153 = smul.addr %s1152, 16
        %s1154 = scalar_lea.vmem [#allocation7], %s1153
        %s1155 = sand.u32 %s219, 1
        %s1156 = scalar_lea.sflag [#allocation9], %s1155
        %s1157 = sand.u32 %s219, 1
        %s1158 = smul.addr %s1157, 16
        %s1159 = scalar_lea.vmem [#allocation8], %s1158
        // Predicated region
        $region57: #{tpu_custom_call.1} parent=47 // pred_check
          %p1160 = pneg %p203
        $region58: #{tpu_custom_call.1} parent=47 // pred_check_branch
          %1162 = sbr.rel (%p1160) target = $region60
        $region59: #{tpu_custom_call.1} parent=47 // pred_region
          %1164 = vsyncadd %s1151, 0
          %s1165 = smul.addr %s28, 2
          %s1166 = smul.addr %s1165, 8
          %s1167 = scalar_lea.hbm %s7, %s1166
          %s1168 = sshll.u32 %s1154, 4
          %s1169 = int_to_ptr.vmem [resolvable:$true] %s1168
          %s1170 = sshll.u32 %s1167, 4
          %s1171 = int_to_ptr.hbm [resolvable:$true] %s1170
          %1176 = dma.vmem_to_hbm [thread:$0]  %s1169, 256, %s1171, %s1151, 128, 128, 8
        $region60: #{tpu_custom_call.1} parent=47 // pred_fallthru
          _
        // Predicated region
        $region61: #{tpu_custom_call.1} parent=47 // pred_check
          %p1177 = pneg %p229
        $region62: #{tpu_custom_call.1} parent=47 // pred_check_branch
          %1179 = sbr.rel (%p1177) target = $region64
        $region63: #{tpu_custom_call.1} parent=47 // pred_region
          %1181 = vsyncadd %s1156, 0
          %s1182 = smul.addr %s28, 2
          %s1183 = smul.addr %s1182, 8
          %s1184 = scalar_lea.hbm %s8, %s1183
          %s1185 = sshll.u32 %s1159, 4
          %s1186 = int_to_ptr.vmem [resolvable:$true] %s1185
          %s1187 = sshll.u32 %s1184, 4
          %s1188 = int_to_ptr.hbm [resolvable:$true] %s1187
          %1193 = dma.vmem_to_hbm [thread:$0]  %s1186, 256, %s1188, %s1156, 128, 128, 8
        $region64: #{tpu_custom_call.1} parent=47 // pred_fallthru
          _
      $region48: #{tpu_custom_call.1} parent=5 // pred_fallthru
        _
      %p1194 = scmp.le.s32.totalorder 2, %s23
      // Predicated region
      $region65: #{tpu_custom_call.1} parent=5 // pred_check
        %p1195 = pneg %p1194
      $region66: #{tpu_custom_call.1} parent=5 // pred_check_branch
        %1197 = sbr.rel (%p1195) target = $region68
      $region67: #{tpu_custom_call.1} parent=5 // pred_region
        %s1198 = ssub.s32 %s23, 2
        // Predicated region
        $region69: #{tpu_custom_call.1} parent=67 // pred_check
          %p1199 = pneg %p209
        $region70: #{tpu_custom_call.1} parent=67 // pred_check_branch
          %1201 = sbr.rel (%p1199) target = $region72
        $region71: #{tpu_custom_call.1} parent=67 // pred_region
          %s1202 = sand.u32 %s194, 1
          %s1203 = scalar_lea.sflag [#allocation4], %s1202
          %s1204 = sand.u32 %s194, 1
          %s1205 = smul.addr %s1204, 16
          %s1206 = scalar_lea.vmem [#allocation7], %s1205
          %1208 = dma.done %s1203, 256
        $region72: #{tpu_custom_call.1} parent=67 // pred_fallthru
          _
        // Predicated region
        $region73: #{tpu_custom_call.1} parent=67 // pred_check
          %p1209 = pneg %p235
        $region74: #{tpu_custom_call.1} parent=67 // pred_check_branch
          %1211 = sbr.rel (%p1209) target = $region76
        $region75: #{tpu_custom_call.1} parent=67 // pred_region
          %s1212 = sand.u32 %s220, 1
          %s1213 = scalar_lea.sflag [#allocation9], %s1212
          %s1214 = sand.u32 %s220, 1
          %s1215 = smul.addr %s1214, 16
          %s1216 = scalar_lea.vmem [#allocation8], %s1215
          %1218 = dma.done %s1213, 256
        $region76: #{tpu_custom_call.1} parent=67 // pred_fallthru
          _
      $region68: #{tpu_custom_call.1} parent=5 // pred_fallthru
        _
    $region6: #{tpu_custom_call.1} parent=1 // loop_footer
      %s27 = sadd.s32 1, %s23
    $region7: #{tpu_custom_call.1} parent=1 // loop_footer_branch
      %22 = sbr.rel target = $region3
    $region8: #{tpu_custom_call.1} parent=1 // loop_exit
      _
    %1219 = vsyncpa [#allocation3], 1
    %s1220 = scalar_lea.sflag [#allocation3], 1
    %1221 = vsyncpa %s1220, 1
    %1222 = vsyncpa [#allocation6], 1
    %1223 = vsyncpa [#allocation4], 1
    %s1224 = scalar_lea.sflag [#allocation4], 1
    %1225 = vsyncpa %s1224, 1
    %1226 = vsyncpa [#allocation9], 1
    %s1227 = scalar_lea.sflag [#allocation9], 1
    %1228 = vsyncpa %s1227, 1

</llo_original>
